<compile_context>
chip_gen: v7x
topology: tpu7x:2x2x1
jax: 0.10.0
libtpu: 0.0.40
codegen_flags: <defaults>
</compile_context>

<pallas_src>
import functools

import jax
import jax.numpy as jnp
from jax import lax
from jax.experimental import pallas as pl
from jax.experimental.pallas import tpu as pltpu


# ----------------------------------------------------------------------------
# small helpers
# ----------------------------------------------------------------------------
def _round_up(a, b):
    return ((a + b - 1) // b) * b


def _abs_pow(x, p):
    """|x| ** p, avoiding generic pow (EUP exp/log) for common / integer p."""
    if p == 1:
        return jnp.abs(x)
    if p == 2:
        return x * x                      # abs not needed for even power
    if isinstance(p, int) and p > 2:
        if p % 2 == 0:
            base, e = x * x, p // 2
        else:
            base, e = jnp.abs(x), p
        result = None
        while e:                          # exponentiation by squaring: ~log2(p) muls
            if e & 1:
                result = base if result is None else result * base
            e >>= 1
            if e:
                base = base * base
        return result
    return jnp.abs(x) ** p                # non-integer p: generic path


def _root(m, p):
    if p == 1:
        return m
    if p == 2:
        return jnp.sqrt(m)
    return m ** (1.0 / p)


def _vmem_capacity_bytes():
    """Physical VMEM per core; conservative 64 MiB (v7x) if the query fails."""
    try:
        cap = getattr(pltpu.get_tpu_info(), "vmem_capacity_bytes", None)
        if cap:
            return int(cap)
    except Exception:
        pass
    return 64 * 1024 * 1024


def _choose_row_tile(rows, granule, max_rows):
    """Row block: multiple of the sublane granule, capped by max_rows, and split
    into >= 2 grid blocks when possible so the 'parallel' axis can shard across
    the two TensorCores of a v7x chip (the extra grid step is noise on v5e/v6e)."""
    max_rows = max(granule, (max_rows // granule) * granule)
    if rows <= granule:
        return rows                       # full extent; too small to split
    target = _round_up(pl.cdiv(rows, 2), granule)
    return min(max_rows, target)


# ----------------------------------------------------------------------------
# streaming path (hw lane-dense / large)
# ----------------------------------------------------------------------------
def _lp_pool_reduce_kernel(x_ref, o_ref, acc_ref, *, p, hw, tile, num_k):
    """Grid = (row_blocks, spatial_blocks), reduction axis last.

    x_ref:   (row_tile, tile)   input block, tile % 128 == 0
    o_ref:   (row_tile, 1)      output block (resident across the k axis)
    acc_ref: (row_tile, 128)    f32 running per-lane sums of |x|^p
    """
    k = pl.program_id(1)
    nchunks = tile // 128

    @pl.when(k == 0)
    def _init():
        acc_ref[...] = jnp.zeros_like(acc_ref)

    def accumulate_full():
        # 128-lane chunks: loads stream vreg-by-vreg, no full-block f32 temp.
        def body(j, acc):
            start = pl.multiple_of(j * 128, 128)
            xj = x_ref[:, pl.ds(start, 128)].astype(jnp.float32)
            return acc + _abs_pow(xj, p)

        acc_ref[...] = lax.fori_loop(0, nchunks, body, acc_ref[...], unroll=True)

    def accumulate_tail():
        # Last reduction step of a ragged H*W: chunk validity is fully static.
        base = (num_k - 1) * tile
        acc = acc_ref[...]
        for j in range(nchunks):
            g0 = base + j * 128
            if g0 >= hw:
                continue                  # fully out of range: contributes zero
            xj = x_ref[:, j * 128:(j + 1) * 128].astype(jnp.float32)
            if g0 + 128 > hw:             # the single partial chunk needs a mask
                cols = lax.broadcasted_iota(jnp.int32, xj.shape, 1)
                xj = jnp.where(cols < hw - g0, xj, 0.0)
            acc = acc + _abs_pow(xj, p)
        acc_ref[...] = acc

    if hw % tile != 0:                    # ragged tail exists (implies num_k > 1)
        @pl.when(k < num_k - 1)
        def _full():
            accumulate_full()

        @pl.when(k == num_k - 1)
        def _tail():
            accumulate_tail()
    else:
        accumulate_full()

    @pl.when(k == num_k - 1)
    def _finalize():
        total = jnp.sum(acc_ref[...], axis=-1, keepdims=True)  # one 128->1 XLU reduce
        mean = total * (1.0 / float(hw))                       # true H*W (masked lanes add 0)
        o_ref[...] = _root(mean, p).astype(o_ref.dtype)


def _lp_pool_streaming(x2, p, *, hw, max_spatial_tile, vmem_budget_bytes,
                       capacity, granule):
    rows = x2.shape[0]
    itemsize = jnp.dtype(x2.dtype).itemsize

    # Spatial block: multiple of 128 lanes, <= hw (hw >= 128 on this path),
    # clamped so a minimal row block still fits the input VMEM budget.
    tile = min((max(max_spatial_tile, 128) // 128) * 128, (hw // 128) * 128)
    tile = min(tile, max(128, (vmem_budget_bytes // (2 * granule * itemsize)) // 128 * 128))
    num_k = pl.cdiv(hw, tile)

    max_rows = min(2048, max(granule, vmem_budget_bytes // (2 * tile * itemsize)))
    row_tile = _choose_row_tile(rows, granule, max_rows)
    num_i = pl.cdiv(rows, row_tile)

    vmem_limit = min(capacity, max(
        16 << 20,
        2 * row_tile * tile * itemsize          # double-buffered input block
        + 2 * row_tile * 128 * itemsize         # output block (lane-padded), x2 buffers
        + row_tile * 128 * 4                    # f32 accumulator scratch
        + 4 * row_tile * 128 * 4                # live f32 chunk temporaries
        + (2 << 20)))                           # compiler-internal headroom

    kernel = functools.partial(
        _lp_pool_reduce_kernel, p=p, hw=hw, tile=tile, num_k=num_k)

    out = pl.pallas_call(
        kernel,
        out_shape=jax.ShapeDtypeStruct((rows, 1), x2.dtype),
        grid_spec=pltpu.PrefetchScalarGridSpec(
            num_scalar_prefetch=0,
            grid=(num_i, num_k),                # reduction axis last
            in_specs=[pl.BlockSpec((row_tile, tile), lambda i, k: (i, k))],
            out_specs=pl.BlockSpec((row_tile, 1), lambda i, k: (i, 0)),
            scratch_shapes=[pltpu.VMEM((row_tile, 128), jnp.float32)],
        ),
        compiler_params=pltpu.CompilerParams(
            dimension_semantics=("parallel", "arbitrary"),
            vmem_limit_bytes=int(vmem_limit),
        ),
    )(x2)
    return out.reshape(rows)


# ----------------------------------------------------------------------------
# packed small-H*W path (lane-dense packing + MXU segmented sum)
# ----------------------------------------------------------------------------
def _pick_pack_factor(rows, hw, lane_cap):
    """Largest k dividing rows with k*hw <= lane_cap (k == 1 always works)."""
    kmax = max(1, min(rows, lane_cap // hw, 256))
    best = 1
    for k in range(1, kmax + 1):
        if rows % k == 0:
            best = k
    return best


def _lp_pool_packed_kernel(x_ref, ones_ref, o_ref, *, p, hw):
    """k output rows packed per VMEM row; per-row segmented spatial sum via MXU.

    x_ref:    (row_tile, k*hw)
    ones_ref: (k*hw, k)    ones_ref[i, j] = 1.0 iff i // hw == j  (constant)
    o_ref:    (row_tile, k)
    """
    xp = _abs_pow(x_ref[...].astype(jnp.float32), p)
    seg_sum = jnp.dot(xp, ones_ref[...], preferred_element_type=jnp.float32)
    o_ref[...] = _root(seg_sum * (1.0 / float(hw)), p).astype(o_ref.dtype)


def _lp_pool_packed(x, p, *, rows, hw, vmem_budget_bytes, capacity, granule,
                    lane_cap=1024):
    itemsize = jnp.dtype(x.dtype).itemsize
    k = _pick_pack_factor(rows, hw, lane_cap)
    L = k * hw
    rows_p = rows // k
    x2 = x.reshape(rows_p, L)             # pure reshape of the contiguous stream

    seg_ids = jnp.repeat(jnp.arange(k, dtype=jnp.int32), hw)              # (L,)
    ones = (seg_ids[:, None] ==
            jnp.arange(k, dtype=jnp.int32)[None, :]).astype(jnp.float32)  # (L, k)

    max_rows = min(1024, max(granule, vmem_budget_bytes // (2 * L * itemsize)))
    row_tile = _choose_row_tile(rows_p, granule, max_rows)
    num_i = pl.cdiv(rows_p, row_tile)

    vmem_limit = min(capacity, max(
        16 << 20,
        2 * row_tile * L * itemsize              # double-buffered input block
        + 2 * L * max(k, 128) * 4                # block-of-ones matrix (resident)
        + 2 * row_tile * max(k, 128) * itemsize  # output block (lane-padded)
        + 3 * row_tile * max(L, 128) * 4         # f32 temporaries (|x|^p, MXU result)
        + (2 << 20)))

    kernel = functools.partial(_lp_pool_packed_kernel, p=p, hw=hw)
    out = pl.pallas_call(
        kernel,
        out_shape=jax.ShapeDtypeStruct((rows_p, k), x.dtype),
        grid_spec=pltpu.PrefetchScalarGridSpec(
            num_scalar_prefetch=0,
            grid=(num_i,),
            in_specs=[pl.BlockSpec((row_tile, L), lambda i: (i, 0)),
                      pl.BlockSpec((L, k), lambda i: (0, 0))],  # constant block, fetched once
            out_specs=pl.BlockSpec((row_tile, k), lambda i: (i, 0)),
        ),
        compiler_params=pltpu.CompilerParams(
            dimension_semantics=("parallel",),
            vmem_limit_bytes=int(vmem_limit),
        ),
    )(x2, ones)
    return out.reshape(rows)


# ----------------------------------------------------------------------------
# public entry point
# ----------------------------------------------------------------------------
def adaptive_lp_pool2d(x, p=2, *, max_spatial_tile=2048,
                       vmem_budget_bytes=16 * 1024 * 1024,
                       small_hw_threshold=256):
    """Pallas implementation of AdaptiveLpPool2d.forward for NCHW input.

    Note: |x|^p is accumulated in f32, so very large magnitudes with p >= 3 can
    overflow exactly like an fp32 PyTorch reference would.
    """
    n, c, h, w = x.shape
    rows, hw = n * c, h * w
    if rows == 0 or hw == 0:
        raise ValueError("adaptive_lp_pool2d requires non-empty N*C and H*W")

    itemsize = jnp.dtype(x.dtype).itemsize
    granule = max(8, 32 // itemsize)                 # sublane granule per dtype
    capacity = _vmem_capacity_bytes()
    vmem_budget_bytes = min(vmem_budget_bytes, capacity // 3)

    if hw < 128 or (hw <= small_hw_threshold and hw % 128 != 0):
        flat = _lp_pool_packed(x, p, rows=rows, hw=hw,
                               vmem_budget_bytes=vmem_budget_bytes,
                               capacity=capacity, granule=granule)
    else:
        flat = _lp_pool_streaming(x.reshape(rows, hw), p, hw=hw,
                                  max_spatial_tile=max_spatial_tile,
                                  vmem_budget_bytes=vmem_budget_bytes,
                                  capacity=capacity, granule=granule)
    return flat.reshape(n, c)


if __name__ == "__main__":
    key = jax.random.PRNGKey(0)
    k1, k2, k3 = jax.random.split(key, 3)

    # Main check: small NCHW input, p = 2 (fast x*x / sqrt, lane-dense hw=256).
    x = jax.random.normal(k1, (2, 4, 16, 16), dtype=jnp.float32)
    out = jax.block_until_ready(adaptive_lp_pool2d(x, p=2))
    ref = jnp.mean(jnp.abs(x) ** 2, axis=(2, 3)) ** 0.5
    assert out.shape == (2, 4), out.shape
    assert out.dtype == x.dtype
    assert jnp.allclose(out, ref, atol=1e-5, rtol=1e-5), (out, ref)

    # Odd integer p, ragged spatial tail (masked last reduction step) and
    # multiple row blocks (tiny VMEM budget forces the row-tiling path).
    x2 = jax.random.normal(k2, (3, 5, 10, 30), dtype=jnp.float32)
    out2 = jax.block_until_ready(
        adaptive_lp_pool2d(x2, p=3, max_spatial_tile=128,
                           vmem_budget_bytes=2 * 128 * 4 * 8))
    ref2 = jnp.mean(jnp.abs(x2) ** 3, axis=(2, 3)) ** (1.0 / 3.0)
    assert out2.shape == (3, 5), out2.shape
    assert jnp.allclose(out2, ref2, atol=1e-5, rtol=1e-4), (out2, ref2)

    # Small-spatial packed path (7x7 global pooling -> MXU segmented sum).
    x3 = jax.random.normal(k3, (2, 8, 7, 7), dtype=jnp.float32)
    out3 = jax.block_until_ready(adaptive_lp_pool2d(x3, p=2))
    ref3 = jnp.mean(jnp.abs(x3) ** 2, axis=(2, 3)) ** 0.5
    assert out3.shape == (2, 8), out3.shape
    assert jnp.allclose(out3, ref3, atol=1e-5, rtol=1e-5), (out3, ref3)

    print("KERNEL_OK")
</pallas_src>

<mosaic_0001>
module attributes {stable_mosaic.version = 11 : i64} {
  func.func @_lp_pool_reduce_kernel(%arg0: i32, %arg1: i32, %arg2: memref<8x256xf32, #tpu.memory_space<vmem>>, %arg3: memref<8x1xf32, #tpu.memory_space<vmem>>, %arg4: memref<8x128xf32, #tpu.memory_space<vmem>>) attributes {dimension_semantics = [#tpu.dimension_semantics<parallel>, #tpu.dimension_semantics<arbitrary>], iteration_bounds = array<i64: 1, 1>, scalar_prefetch = 0 : i64, scratch_operands = 1 : i64, tpu.core_type = #tpu.core_type<tc>, window_params = [{transform_indices = @transform_0, window_bounds = array<i64: 8, 256>}, {transform_indices = @transform_1, window_bounds = array<i64: 8, 1>}]} {
    %c0_i32 = arith.constant 0 : i32
    %0 = arith.cmpi eq, %arg1, %c0_i32 : i32
    %1 = arith.extui %0 : i1 to i32
    %c0_i32_0 = arith.constant 0 : i32
    %2 = arith.cmpi ne, %1, %c0_i32_0 : i32
    scf.if %2 {
      %cst = arith.constant 0.000000e+00 : f32
      %20 = vector.broadcast %cst : f32 to vector<8x128xf32>
      %c0_10 = arith.constant 0 : index
      %c0_11 = arith.constant 0 : index
      %21 = vector.load %arg4[%c0_10, %c0_11] : memref<8x128xf32, #tpu.memory_space<vmem>>, vector<8x128xf32>
      tpu.vector_store %arg4[%c0_10, %c0_11], %20 {strides = array<i32>} : memref<8x128xf32, #tpu.memory_space<vmem>>, vector<8x128xf32>,
    } else {
    }
    %c0 = arith.constant 0 : index
    %c0_1 = arith.constant 0 : index
    %3 = vector.load %arg4[%c0, %c0_1] : memref<8x128xf32, #tpu.memory_space<vmem>>, vector<8x128xf32>
    %c0_i32_2 = arith.constant 0 : i32
    %c128_i32 = arith.constant 128 : i32
    %4 = arith.muli %c0_i32_2, %c128_i32 : i32
    %5 = tpu.assume_multiple %4, 128 : i32
    %c0_3 = arith.constant 0 : index
    %6 = arith.index_cast %5 : i32 to index
    %7 = vector.load %arg2[%c0_3, %6] : memref<8x256xf32, #tpu.memory_space<vmem>>, vector<8x128xf32>
    %8 = arith.mulf %7, %7 : vector<8x128xf32>
    %9 = arith.addf %3, %8 : vector<8x128xf32>
    %c1_i32 = arith.constant 1 : i32
    %c128_i32_4 = arith.constant 128 : i32
    %10 = arith.muli %c1_i32, %c128_i32_4 : i32
    %11 = tpu.assume_multiple %10, 128 : i32
    %c0_5 = arith.constant 0 : index
    %12 = arith.index_cast %11 : i32 to index
    %13 = vector.load %arg2[%c0_5, %12] : memref<8x256xf32, #tpu.memory_space<vmem>>, vector<8x128xf32>
    %14 = arith.mulf %13, %13 : vector<8x128xf32>
    %15 = arith.addf %9, %14 : vector<8x128xf32>
    %c2_i32 = arith.constant 2 : i32
    %c0_6 = arith.constant 0 : index
    %c0_7 = arith.constant 0 : index
    %16 = vector.load %arg4[%c0_6, %c0_7] : memref<8x128xf32, #tpu.memory_space<vmem>>, vector<8x128xf32>
    tpu.vector_store %arg4[%c0_6, %c0_7], %15 {strides = array<i32>} : memref<8x128xf32, #tpu.memory_space<vmem>>, vector<8x128xf32>,
    %c0_i32_8 = arith.constant 0 : i32
    %17 = arith.cmpi eq, %arg1, %c0_i32_8 : i32
    %18 = arith.extui %17 : i1 to i32
    %c0_i32_9 = arith.constant 0 : i32
    %19 = arith.cmpi ne, %18, %c0_i32_9 : i32
    scf.if %19 {
      %c0_10 = arith.constant 0 : index
      %c0_11 = arith.constant 0 : index
      %20 = vector.load %arg4[%c0_10, %c0_11] : memref<8x128xf32, #tpu.memory_space<vmem>>, vector<8x128xf32>
      %cst = arith.constant dense<0.000000e+00> : vector<8xf32>
      %21 = vector.multi_reduction <add>, %20, %cst [1] : vector<8x128xf32> to vector<8xf32>
      %22 = vector.shape_cast %21 : vector<8xf32> to vector<8x1xf32>
      %cst_12 = arith.constant 3.906250e-03 : f32
      %23 = vector.broadcast %cst_12 : f32 to vector<8x1xf32>
      %24 = arith.mulf %22, %23 : vector<8x1xf32>
      %25 = math.sqrt %24 : vector<8x1xf32>
      %c0_13 = arith.constant 0 : index
      %c0_14 = arith.constant 0 : index
      %26 = vector.load %arg3[%c0_13, %c0_14] : memref<8x1xf32, #tpu.memory_space<vmem>>, vector<8x1xf32>
      tpu.vector_store %arg3[%c0_13, %c0_14], %25 {strides = array<i32>} : memref<8x1xf32, #tpu.memory_space<vmem>>, vector<8x1xf32>,
    } else {
    }
    return
  }
  func.func @transform_0(%arg0: i32, %arg1: i32) -> (i32, i32) {
    %c0_i32 = arith.constant 0 : i32
    return %arg0, %arg1 : i32, i32
  }
  func.func @transform_1(%arg0: i32, %arg1: i32) -> (i32, i32) {
    %c0_i32 = arith.constant 0 : i32
    %c0_i32_0 = arith.constant 0 : i32
    return %arg0, %c0_i32 : i32, i32
  }
}

</mosaic_0001>

<llo_original>
// kernel: tpu_custom_call.1
$region0: #{tpu_custom_call.1}
  #allocation0 [shape = 'u32[]', space=smem, size = 0x4, offset = 0x4, fixed_abs, tag = 'smem constant byte address 0x4 - core index']
  #allocation1 [shape = 'u32[144,128]{1,0:T(1,128)}', space=vmem, size = 0x12000, scoped, tag = 'internal scratch']
  #allocation2 [shape = 'f32[8,128]{1,0:T(8,128)}', space=vmem, size = 0x1000, scoped, tag = 'scratch operand']
  %s0 = inlined_call_operand.hbm [shape: f32[8,256], index: 0, kind: input, shape index: {}]
  %s1 = inlined_call_operand.vmem [shape: f32[8,1], index: 1, kind: output, shape index: {}]
  %s2 = sld [smem:[#allocation0]]
  $region26: #{tpu_custom_call.1} parent=0
    _
  %s4 = ssub.s32 1, %s2
  %s5 = scalar_select 0, %s4, %s2
  $region1: #{tpu_custom_call.1} parent=0
    #allocation3 [shape = 'u8[8192]{0}', space=vmem, size = 0x2000, scoped, tag = 'input window, operand 0, single buffered']
    #allocation4 [shape = 's32[1]{0}', space=sflag, size = 0x4, scoped, tag = 'scoped memory for tpu_custom_call.1']
    %6 = vsyncpa [#allocation4], 0
    // Predicated region
    $region2: #{tpu_custom_call.1} parent=1 // pred_check
      _
    $region3: #{tpu_custom_call.1} parent=1 // pred_check_branch
      %8 = sbr.rel (0) target = $region5
    $region4: #{tpu_custom_call.1} parent=1 // pred_region
      %s10 = ssub.s32 256, 256
      %11 = vsyncadd [#allocation4], %s10
      %s13 = sshll.u32 [#allocation3], 4
      %s14 = int_to_ptr.vmem [resolvable:$true] %s13
      %16 = dma.hbm_to_vmem [thread:$0]  %s0, 256, %s14, [#allocation4]
    $region5: #{tpu_custom_call.1} parent=1 // pred_fallthru
      _
    // Predicated region
    $region6: #{tpu_custom_call.1} parent=1 // pred_check
      _
    $region7: #{tpu_custom_call.1} parent=1 // pred_check_branch
      %18 = sbr.rel (0) target = $region9
    $region8: #{tpu_custom_call.1} parent=1 // pred_region
      %19 = dma.done [#allocation4], 256
    $region9: #{tpu_custom_call.1} parent=1 // pred_fallthru
      _
    %p20 = scmp.eq.s32.totalorder 0, 0
    // Predicated region
    $region10: #{tpu_custom_call.1} parent=1 // pred_check
      %p21 = pneg %p20
    $region11: #{tpu_custom_call.1} parent=1 // pred_check_branch
      %23 = sbr.rel (%p21) target = $region13
    $region12: #{tpu_custom_call.1} parent=1 // pred_region
      %24 = vst [vmem:[#allocation2] sm:$0xff] 0.0
    $region13: #{tpu_custom_call.1} parent=1 // pred_fallthru
      _
    %v25 = vld [vmem:[#allocation2] sm:$0xff]
    %v26 = vld [vmem:[#allocation3] sm:$0xff]
    %v27 = vmul.f32 %v26, %v26
    %v28 = vadd.f32 %v25, %v27
    %s29 = scalar_lea.vmem [#allocation3], 8
    %v30 = vld [vmem:[%s29] sm:$0xff]
    %v31 = vmul.f32 %v30, %v30
    %v32 = vadd.f32 %v28, %v31
    %33 = vst [vmem:[#allocation2] sm:$0xff] %v32
    // Predicated region
    $region14: #{tpu_custom_call.1} parent=1 // pred_check
      %p34 = pneg %p20
    $region15: #{tpu_custom_call.1} parent=1 // pred_check_branch
      %36 = sbr.rel (%p34) target = $region17
    $region16: #{tpu_custom_call.1} parent=1 // pred_region
      %v37 = vld [vmem:[#allocation2] sm:$0xff]
      %38 = vadd.xlane.f32.xlu0 %v37
      %v39 = vpop.xlane.xlu0 %38
      %v40 = vmul.f32 %v39, 0.00390625
      %v41 = vrsqrt.pop %v40
      %v42 = vmul.f32 %v40, %v41
      %vm43 = vcmp.eq.f32.partialorder %v40, inf
      %v44 = vsel %vm43, %v40, %v42
      %vm45 = vcmp.eq.f32.partialorder %v40, 0.0
      %v46 = vand.u32 %v40, 2147483648
      %v47 = vsel %vm45, %v46, %v44
      %vm48 = vcmask 7168
      %49 = vst.msk [vmem:[%s1] sm:$0xff] %vm48, %v47
    $region17: #{tpu_custom_call.1} parent=1 // pred_fallthru
      _
    // Predicated region
    $region18: #{tpu_custom_call.1} parent=1 // pred_check
      _
    $region19: #{tpu_custom_call.1} parent=1 // pred_check_branch
      %51 = sbr.rel (0) target = $region21
    $region20: #{tpu_custom_call.1} parent=1 // pred_region
      _
    $region21: #{tpu_custom_call.1} parent=1 // pred_fallthru
      _
    // Predicated region
    $region22: #{tpu_custom_call.1} parent=1 // pred_check
      _
    $region23: #{tpu_custom_call.1} parent=1 // pred_check_branch
      %53 = sbr.rel (0) target = $region25
    $region24: #{tpu_custom_call.1} parent=1 // pred_region
      _
    $region25: #{tpu_custom_call.1} parent=1 // pred_fallthru
      _
    %54 = vsyncpa [#allocation4], 1

</llo_original>
